<compile_context>
chip_gen: v7x
topology: tpu7x:2x2x1
jax: 0.10.0
libtpu: 0.0.40
codegen_flags: <defaults>
</compile_context>

<pallas_src>
import functools

import jax
import jax.numpy as jnp
from jax import lax
from jax.experimental import pallas as pl
from jax.experimental.pallas import tpu as pltpu


def _round_up(n, m):
    return ((n + m - 1) // m) * m


def block_kernel(xp_ref, w1_ref, t1_ref, w2_ref, t2_ref, o_ref, *, P, K, pad):
    """One grid step = TB batch elements (TB*P rows in the MXU M dim).

    xp_ref : [TB, P+2*pad, Cin] bf16  (channels-last input, spatially zero-padded)
    w1_ref : [K, Cin, Fp]       bf16  (BN1-folded conv_entry weights)
    t1_ref : [1, Fp]            f32   (folded bias + BN1 shift)
    w2_ref : [K, Fp, Fp]        bf16  (BN2-folded conv_enforce weights)
    t2_ref : [1, Fp]            f32
    o_ref  : [TB, P, Fp]        bf16  (lane-dense output tile)
    """
    TB, _, Cin = xp_ref.shape
    Fp = o_ref.shape[-1]

    xp = xp_ref[...]                                               # [TB, P+2*pad, Cin]

    # ---- conv_entry: K accumulating matmuls (no im2col slab), folded BN1 + ReLU.
    acc1 = jnp.zeros((TB * P, Fp), jnp.float32)
    for k in range(K):                                             # K=3, unrolled at trace time
        xk = xp[:, k:k + P, :].reshape(TB * P, Cin)
        acc1 = acc1 + jnp.dot(xk, w1_ref[k], preferred_element_type=jnp.float32)
    # bf16 right after the ReLU: conv2's LHS is bf16 everywhere (MXU-native, half the bytes).
    h = jnp.maximum(acc1 + t1_ref[...], 0.0).astype(jnp.bfloat16)  # [TB*P, Fp]

    # ---- conv_enforce: bf16 spatial zero-pad + K accumulating matmuls, folded BN2 + ReLU.
    h = h.reshape(TB, P, Fp)
    zrows = jnp.zeros((TB, pad, Fp), jnp.bfloat16)
    hp = jnp.concatenate([zrows, h, zrows], axis=1)                # [TB, P+2*pad, Fp] bf16
    acc2 = jnp.zeros((TB * P, Fp), jnp.float32)
    for k in range(K):
        hk = hp[:, k:k + P, :].reshape(TB * P, Fp)
        acc2 = acc2 + jnp.dot(hk, w2_ref[k], preferred_element_type=jnp.float32)
    y = jnp.maximum(acc2 + t2_ref[...], 0.0)                       # [TB*P, Fp] f32

    o_ref[...] = y.reshape(TB, P, Fp).astype(o_ref.dtype)          # bf16, unmasked 128-lane stores


def block_forward(x_ncl, params, *, K, pad, eps=1e-5, channels_last_out=False):
    """Wrapper: PyTorch NCL in; NCL out by default (channels_last_out=True skips the
    final transpose for chained channels-last consumers). Glue (layout, padding,
    BN fold) is plain JAX; the two convs + BN + ReLU run in one Pallas kernel."""
    B, Cin, P = x_ncl.shape
    F = params["w1"].shape[0]              # torch Conv1d weight: (out, in, K)
    assert 2 * pad == K - 1, "Block assumes 'same' convolutions (e.g. kernel_size=3, padding=1)"
    Fp = _round_up(F, 128)                 # lane-dense feature dim (stores + MXU N dim)
    # Note: P that is not a multiple of 16 still works (full-dim blocks), it just
    # costs a relayout copy on the in-kernel reshapes.

    # Fold eval-mode BatchNorm and the conv bias into weights + one shift per layer.
    s1 = params["gamma1"] / jnp.sqrt(params["var1"] + eps)
    t1 = params["b1"] * s1 + params["beta1"] - params["mean1"] * s1
    s2 = params["gamma2"] / jnp.sqrt(params["var2"] + eps)
    t2 = params["b2"] * s2 + params["beta2"] - params["mean2"] * s2

    def fold_w(w, s, cin_pad):
        wf = w.astype(jnp.float32) * s[:, None, None]              # (F, Cin, K)
        wf = jnp.transpose(wf, (2, 1, 0))                          # (K, Cin, F)
        wf = jnp.pad(wf, ((0, 0), (0, cin_pad - wf.shape[1]), (0, Fp - F)))
        return wf.astype(jnp.bfloat16)                             # [K, cin_pad, Fp]

    w1 = fold_w(params["w1"], s1, Cin)                             # [K, Cin, Fp]
    w2 = fold_w(params["w2"], s2, Fp)                              # [K, Fp,  Fp]
    t1p = jnp.pad(t1.astype(jnp.float32), (0, Fp - F)).reshape(1, Fp)
    t2p = jnp.pad(t2.astype(jnp.float32), (0, Fp - F)).reshape(1, Fp)

    # Batch tiling: target ~512 MXU rows per step; keep >= 2 grid steps when B >= 2
    # so the "parallel" batch axis can shard across v7x's two TensorCores.
    rows_target = 512
    TB = max(1, min(B, rows_target // max(P, 1)))
    if B >= 2:
        TB = min(TB, max(1, B // 2))
    Bp = _round_up(B, TB)
    Psp = P + 2 * pad

    # channels-last, bf16, spatial zero pad only (no im2col duplication in HBM).
    # Dropout1d is identity in eval mode.
    xt = jnp.transpose(x_ncl, (0, 2, 1)).astype(jnp.bfloat16)      # [B, P, Cin]
    xt = jnp.pad(xt, ((0, Bp - B), (pad, pad), (0, 0)))            # [Bp, Psp, Cin]

    kernel = functools.partial(block_kernel, P=P, K=K, pad=pad)
    vec_spec = pl.BlockSpec((1, Fp), lambda b: (0, 0))

    out = pl.pallas_call(
        kernel,
        out_shape=jax.ShapeDtypeStruct((Bp, P, Fp), jnp.bfloat16),
        grid_spec=pltpu.PrefetchScalarGridSpec(
            num_scalar_prefetch=0,
            grid=(Bp // TB,),
            in_specs=[
                pl.BlockSpec((TB, Psp, Cin), lambda b: (b, 0, 0)),   # padded input block
                pl.BlockSpec((K, Cin, Fp), lambda b: (0, 0, 0)),     # w1 (folded)
                vec_spec,                                            # t1
                pl.BlockSpec((K, Fp, Fp), lambda b: (0, 0, 0)),      # w2 (folded)
                vec_spec,                                            # t2
            ],
            out_specs=pl.BlockSpec((TB, P, Fp), lambda b: (b, 0, 0)),
        ),
        compiler_params=pltpu.CompilerParams(
            dimension_semantics=("parallel",)),    # batch axis has no carry
    )(xt, w1, t1p, w2, t2p)

    out = out[:B, :, :F]                           # drop batch / feature lane padding
    if channels_last_out:
        return out                                 # [B, P, F] (skip the NCL transpose)
    return jnp.transpose(out, (0, 2, 1))           # PyTorch NCL [B, F, P]


def block_reference(x, params, *, pad, eps=1e-5):
    """Pure-JAX f32 reference (NCL layout, same eval-mode semantics)."""
    def conv1d(x, w, b):
        y = lax.conv_general_dilated(
            x, w, window_strides=(1,), padding=((pad, pad),),
            dimension_numbers=("NCH", "OIH", "NCH"))
        return y + b[None, :, None]

    def bn(x, g, be, m, v):
        return (x - m[None, :, None]) / jnp.sqrt(v[None, :, None] + eps) \
            * g[None, :, None] + be[None, :, None]

    h = conv1d(x, params["w1"], params["b1"])
    h = jnp.maximum(bn(h, params["gamma1"], params["beta1"],
                       params["mean1"], params["var1"]), 0.0)
    h = conv1d(h, params["w2"], params["b2"])
    return jnp.maximum(bn(h, params["gamma2"], params["beta2"],
                          params["mean2"], params["var2"]), 0.0)


if __name__ == "__main__":
    # Small shapes implied by the module: x is [B, in_channels, P]
    B, Cin, F, P = 2, 4, 8, 16
    K, pad = 3, 1  # param_conv = dict(kernel_size=3, padding=1)

    key = jax.random.PRNGKey(0)
    keys = jax.random.split(key, 13)

    x = jax.random.normal(keys[0], (B, Cin, P), jnp.float32)

    params = {
        "w1": 0.2 * jax.random.normal(keys[1], (F, Cin, K), jnp.float32),
        "b1": 0.1 * jax.random.normal(keys[2], (F,), jnp.float32),
        "gamma1": 1.0 + 0.1 * jax.random.normal(keys[3], (F,), jnp.float32),
        "beta1": 0.1 * jax.random.normal(keys[4], (F,), jnp.float32),
        "mean1": 0.05 * jax.random.normal(keys[5], (F,), jnp.float32),
        "var1": 0.5 + jnp.abs(jax.random.normal(keys[6], (F,), jnp.float32)),
        "w2": 0.2 * jax.random.normal(keys[7], (F, F, K), jnp.float32),
        "b2": 0.1 * jax.random.normal(keys[8], (F,), jnp.float32),
        "gamma2": 1.0 + 0.1 * jax.random.normal(keys[9], (F,), jnp.float32),
        "beta2": 0.1 * jax.random.normal(keys[10], (F,), jnp.float32),
        "mean2": 0.05 * jax.random.normal(keys[11], (F,), jnp.float32),
        "var2": 0.5 + jnp.abs(jax.random.normal(keys[12], (F,), jnp.float32)) * 0.7,
    }

    out = block_forward(x, params, K=K, pad=pad)
    out = jax.block_until_ready(out)

    ref = jax.block_until_ready(block_reference(x, params, pad=pad))
    assert out.shape == (B, F, P), out.shape
    # bf16 matmul operands + bf16 output storage -> loosened tolerance vs the f32 reference.
    assert jnp.allclose(out.astype(jnp.float32), ref, atol=5e-2, rtol=5e-2), \
        float(jnp.max(jnp.abs(out.astype(jnp.float32) - ref)))

    print("KERNEL_OK")
</pallas_src>

<mosaic_0001>
module attributes {stable_mosaic.version = 11 : i64} {
  func.func @block_kernel(%arg0: i32, %arg1: memref<1x18x4xbf16, #tpu.memory_space<vmem>>, %arg2: memref<3x4x128xbf16, #tpu.memory_space<vmem>>, %arg3: memref<1x128xf32, #tpu.memory_space<vmem>>, %arg4: memref<3x128x128xbf16, #tpu.memory_space<vmem>>, %arg5: memref<1x128xf32, #tpu.memory_space<vmem>>, %arg6: memref<1x16x128xbf16, #tpu.memory_space<vmem>>) attributes {dimension_semantics = [#tpu.dimension_semantics<parallel>], iteration_bounds = array<i64: 2>, scalar_prefetch = 0 : i64, scratch_operands = 0 : i64, tpu.core_type = #tpu.core_type<tc>, window_params = [{transform_indices = @transform_0, window_bounds = array<i64: 1, 18, 4>}, {pipeline_mode = #tpu.pipeline_mode<synchronous>, transform_indices = @transform_1, window_bounds = array<i64: 3, 4, 128>}, {pipeline_mode = #tpu.pipeline_mode<synchronous>, transform_indices = @transform_2, window_bounds = array<i64: 1, 128>}, {pipeline_mode = #tpu.pipeline_mode<synchronous>, transform_indices = @transform_3, window_bounds = array<i64: 3, 128, 128>}, {pipeline_mode = #tpu.pipeline_mode<synchronous>, transform_indices = @transform_4, window_bounds = array<i64: 1, 128>}, {transform_indices = @transform_5, window_bounds = array<i64: 1, 16, 128>}]} {
    %c0 = arith.constant 0 : index
    %c0_0 = arith.constant 0 : index
    %c0_1 = arith.constant 0 : index
    %0 = vector.load %arg1[%c0, %c0_0, %c0_1] : memref<1x18x4xbf16, #tpu.memory_space<vmem>>, vector<1x18x4xbf16>
    %cst = arith.constant 0.000000e+00 : f32
    %1 = vector.broadcast %cst : f32 to vector<16x128xf32>
    %2 = vector.extract_strided_slice %0 {offsets = [0, 0, 0], sizes = [1, 16, 4], strides = [1, 1, 1]} : vector<1x18x4xbf16> to vector<1x16x4xbf16>
    %3 = vector.shape_cast %2 : vector<1x16x4xbf16> to vector<16x4xbf16>
    %c0_2 = arith.constant 0 : index
    %c0_3 = arith.constant 0 : index
    %c0_4 = arith.constant 0 : index
    %4 = vector.load %arg2[%c0_2, %c0_3, %c0_4] : memref<3x4x128xbf16, #tpu.memory_space<vmem>>, vector<1x4x128xbf16>
    %5 = vector.shape_cast %4 : vector<1x4x128xbf16> to vector<4x128xbf16>
    %cst_5 = arith.constant dense<0.000000e+00> : vector<16x128xf32>
    %6 = tpu.matmul %3, %5, %cst_5 {dimension_numbers = #tpu.dot_dimension_numbers<[1], [0], [0], [1], [0, 0, 1, 1], [], []>} : vector<16x4xbf16>, vector<4x128xbf16>, vector<16x128xf32> -> vector<16x128xf32>
    %7 = arith.addf %1, %6 : vector<16x128xf32>
    %8 = vector.extract_strided_slice %0 {offsets = [0, 1, 0], sizes = [1, 16, 4], strides = [1, 1, 1]} : vector<1x18x4xbf16> to vector<1x16x4xbf16>
    %9 = vector.shape_cast %8 : vector<1x16x4xbf16> to vector<16x4xbf16>
    %c1 = arith.constant 1 : index
    %c0_6 = arith.constant 0 : index
    %c0_7 = arith.constant 0 : index
    %10 = vector.load %arg2[%c1, %c0_6, %c0_7] : memref<3x4x128xbf16, #tpu.memory_space<vmem>>, vector<1x4x128xbf16>
    %11 = vector.shape_cast %10 : vector<1x4x128xbf16> to vector<4x128xbf16>
    %cst_8 = arith.constant dense<0.000000e+00> : vector<16x128xf32>
    %12 = tpu.matmul %9, %11, %cst_8 {dimension_numbers = #tpu.dot_dimension_numbers<[1], [0], [0], [1], [0, 0, 1, 1], [], []>} : vector<16x4xbf16>, vector<4x128xbf16>, vector<16x128xf32> -> vector<16x128xf32>
    %13 = arith.addf %7, %12 : vector<16x128xf32>
    %14 = vector.extract_strided_slice %0 {offsets = [0, 2, 0], sizes = [1, 16, 4], strides = [1, 1, 1]} : vector<1x18x4xbf16> to vector<1x16x4xbf16>
    %15 = vector.shape_cast %14 : vector<1x16x4xbf16> to vector<16x4xbf16>
    %c2 = arith.constant 2 : index
    %c0_9 = arith.constant 0 : index
    %c0_10 = arith.constant 0 : index
    %16 = vector.load %arg2[%c2, %c0_9, %c0_10] : memref<3x4x128xbf16, #tpu.memory_space<vmem>>, vector<1x4x128xbf16>
    %17 = vector.shape_cast %16 : vector<1x4x128xbf16> to vector<4x128xbf16>
    %cst_11 = arith.constant dense<0.000000e+00> : vector<16x128xf32>
    %18 = tpu.matmul %15, %17, %cst_11 {dimension_numbers = #tpu.dot_dimension_numbers<[1], [0], [0], [1], [0, 0, 1, 1], [], []>} : vector<16x4xbf16>, vector<4x128xbf16>, vector<16x128xf32> -> vector<16x128xf32>
    %19 = arith.addf %13, %18 : vector<16x128xf32>
    %c0_12 = arith.constant 0 : index
    %c0_13 = arith.constant 0 : index
    %20 = vector.load %arg3[%c0_12, %c0_13] : memref<1x128xf32, #tpu.memory_space<vmem>>, vector<1x128xf32>
    %21 = vector.broadcast %20 : vector<1x128xf32> to vector<16x128xf32>
    %22 = arith.addf %19, %21 : vector<16x128xf32>
    %cst_14 = arith.constant 0.000000e+00 : f32
    %23 = vector.broadcast %cst_14 : f32 to vector<16x128xf32>
    %24 = arith.maximumf %22, %23 : vector<16x128xf32>
    %25 = arith.truncf %24 : vector<16x128xf32> to vector<16x128xbf16>
    %26 = vector.shape_cast %25 : vector<16x128xbf16> to vector<1x16x128xbf16>
    %cst_15 = arith.constant 0.000000e+00 : bf16
    %27 = vector.broadcast %cst_15 : bf16 to vector<1x1x128xbf16>
    %28 = tpu.concatenate %27, %26, %27 in 1 : vector<1x1x128xbf16>, vector<1x16x128xbf16>, vector<1x1x128xbf16> -> vector<1x18x128xbf16>
    %cst_16 = arith.constant 0.000000e+00 : f32
    %29 = vector.broadcast %cst_16 : f32 to vector<16x128xf32>
    %30 = vector.extract_strided_slice %28 {offsets = [0, 0, 0], sizes = [1, 16, 128], strides = [1, 1, 1]} : vector<1x18x128xbf16> to vector<1x16x128xbf16>
    %31 = vector.shape_cast %30 : vector<1x16x128xbf16> to vector<16x128xbf16>
    %c0_17 = arith.constant 0 : index
    %c0_18 = arith.constant 0 : index
    %c0_19 = arith.constant 0 : index
    %32 = vector.load %arg4[%c0_17, %c0_18, %c0_19] : memref<3x128x128xbf16, #tpu.memory_space<vmem>>, vector<1x128x128xbf16>
    %33 = vector.shape_cast %32 : vector<1x128x128xbf16> to vector<128x128xbf16>
    %cst_20 = arith.constant dense<0.000000e+00> : vector<16x128xf32>
    %34 = tpu.matmul %31, %33, %cst_20 {dimension_numbers = #tpu.dot_dimension_numbers<[1], [0], [0], [1], [0, 0, 1, 1], [], []>} : vector<16x128xbf16>, vector<128x128xbf16>, vector<16x128xf32> -> vector<16x128xf32>
    %35 = arith.addf %29, %34 : vector<16x128xf32>
    %36 = vector.extract_strided_slice %28 {offsets = [0, 1, 0], sizes = [1, 16, 128], strides = [1, 1, 1]} : vector<1x18x128xbf16> to vector<1x16x128xbf16>
    %37 = vector.shape_cast %36 : vector<1x16x128xbf16> to vector<16x128xbf16>
    %c1_21 = arith.constant 1 : index
    %c0_22 = arith.constant 0 : index
    %c0_23 = arith.constant 0 : index
    %38 = vector.load %arg4[%c1_21, %c0_22, %c0_23] : memref<3x128x128xbf16, #tpu.memory_space<vmem>>, vector<1x128x128xbf16>
    %39 = vector.shape_cast %38 : vector<1x128x128xbf16> to vector<128x128xbf16>
    %cst_24 = arith.constant dense<0.000000e+00> : vector<16x128xf32>
    %40 = tpu.matmul %37, %39, %cst_24 {dimension_numbers = #tpu.dot_dimension_numbers<[1], [0], [0], [1], [0, 0, 1, 1], [], []>} : vector<16x128xbf16>, vector<128x128xbf16>, vector<16x128xf32> -> vector<16x128xf32>
    %41 = arith.addf %35, %40 : vector<16x128xf32>
    %42 = vector.extract_strided_slice %28 {offsets = [0, 2, 0], sizes = [1, 16, 128], strides = [1, 1, 1]} : vector<1x18x128xbf16> to vector<1x16x128xbf16>
    %43 = vector.shape_cast %42 : vector<1x16x128xbf16> to vector<16x128xbf16>
    %c2_25 = arith.constant 2 : index
    %c0_26 = arith.constant 0 : index
    %c0_27 = arith.constant 0 : index
    %44 = vector.load %arg4[%c2_25, %c0_26, %c0_27] : memref<3x128x128xbf16, #tpu.memory_space<vmem>>, vector<1x128x128xbf16>
    %45 = vector.shape_cast %44 : vector<1x128x128xbf16> to vector<128x128xbf16>
    %cst_28 = arith.constant dense<0.000000e+00> : vector<16x128xf32>
    %46 = tpu.matmul %43, %45, %cst_28 {dimension_numbers = #tpu.dot_dimension_numbers<[1], [0], [0], [1], [0, 0, 1, 1], [], []>} : vector<16x128xbf16>, vector<128x128xbf16>, vector<16x128xf32> -> vector<16x128xf32>
    %47 = arith.addf %41, %46 : vector<16x128xf32>
    %c0_29 = arith.constant 0 : index
    %c0_30 = arith.constant 0 : index
    %48 = vector.load %arg5[%c0_29, %c0_30] : memref<1x128xf32, #tpu.memory_space<vmem>>, vector<1x128xf32>
    %49 = vector.broadcast %48 : vector<1x128xf32> to vector<16x128xf32>
    %50 = arith.addf %47, %49 : vector<16x128xf32>
    %cst_31 = arith.constant 0.000000e+00 : f32
    %51 = vector.broadcast %cst_31 : f32 to vector<16x128xf32>
    %52 = arith.maximumf %50, %51 : vector<16x128xf32>
    %53 = vector.shape_cast %52 : vector<16x128xf32> to vector<1x16x128xf32>
    %54 = arith.truncf %53 : vector<1x16x128xf32> to vector<1x16x128xbf16>
    %c0_32 = arith.constant 0 : index
    %c0_33 = arith.constant 0 : index
    %c0_34 = arith.constant 0 : index
    %55 = vector.load %arg6[%c0_32, %c0_33, %c0_34] : memref<1x16x128xbf16, #tpu.memory_space<vmem>>, vector<1x16x128xbf16>
    tpu.vector_store %arg6[%c0_32, %c0_33, %c0_34], %54 {strides = array<i32>} : memref<1x16x128xbf16, #tpu.memory_space<vmem>>, vector<1x16x128xbf16>,
    return
  }
  func.func @transform_0(%arg0: i32) -> (i32, i32, i32) {
    %c0_i32 = arith.constant 0 : i32
    %c0_i32_0 = arith.constant 0 : i32
    %c0_i32_1 = arith.constant 0 : i32
    return %arg0, %c0_i32, %c0_i32_0 : i32, i32, i32
  }
  func.func @transform_1(%arg0: i32) -> (i32, i32, i32) {
    %c0_i32 = arith.constant 0 : i32
    %c0_i32_0 = arith.constant 0 : i32
    %c0_i32_1 = arith.constant 0 : i32
    %c0_i32_2 = arith.constant 0 : i32
    return %c0_i32, %c0_i32_0, %c0_i32_1 : i32, i32, i32
  }
  func.func @transform_2(%arg0: i32) -> (i32, i32) {
    %c0_i32 = arith.constant 0 : i32
    %c0_i32_0 = arith.constant 0 : i32
    %c0_i32_1 = arith.constant 0 : i32
    return %c0_i32, %c0_i32_0 : i32, i32
  }
  func.func @transform_3(%arg0: i32) -> (i32, i32, i32) {
    %c0_i32 = arith.constant 0 : i32
    %c0_i32_0 = arith.constant 0 : i32
    %c0_i32_1 = arith.constant 0 : i32
    %c0_i32_2 = arith.constant 0 : i32
    return %c0_i32, %c0_i32_0, %c0_i32_1 : i32, i32, i32
  }
  func.func @transform_4(%arg0: i32) -> (i32, i32) {
    %c0_i32 = arith.constant 0 : i32
    %c0_i32_0 = arith.constant 0 : i32
    %c0_i32_1 = arith.constant 0 : i32
    return %c0_i32, %c0_i32_0 : i32, i32
  }
  func.func @transform_5(%arg0: i32) -> (i32, i32, i32) {
    %c0_i32 = arith.constant 0 : i32
    %c0_i32_0 = arith.constant 0 : i32
    %c0_i32_1 = arith.constant 0 : i32
    return %arg0, %c0_i32, %c0_i32_0 : i32, i32, i32
  }
}

</mosaic_0001>

<llo_original>
// kernel: tpu_custom_call.1
$region0: #{tpu_custom_call.1}
  #allocation0 [shape = 'u32[]', space=smem, size = 0x4, offset = 0x4, fixed_abs, tag = 'smem constant byte address 0x4 - core index']
  #allocation1 [shape = 'u32[144,128]{1,0:T(1,128)}', space=vmem, size = 0x12000, scoped, tag = 'internal scratch']
  %s0 = inlined_call_operand.vmem [shape: bf16[2,18,4], index: 0, kind: input, shape index: {}]
  %s1 = inlined_call_operand.vmem [shape: bf16[3,4,128], index: 1, kind: input, shape index: {}]
  %s2 = inlined_call_operand.vmem [shape: f32[1,128], index: 2, kind: input, shape index: {}]
  %s3 = inlined_call_operand.hbm [shape: bf16[3,128,128], index: 3, kind: input, shape index: {}]
  %s4 = inlined_call_operand.vmem [shape: f32[1,128], index: 4, kind: input, shape index: {}]
  %s5 = inlined_call_operand.hbm [shape: bf16[2,16,128], index: 5, kind: output, shape index: {}]
  %s6 = sld [smem:[#allocation0]]
  $region57: #{tpu_custom_call.1} parent=0
    _
  %s8 = ssub.s32 1, %s6
  %s9 = scalar_select 0, %s8, %s6
  $region1: #{tpu_custom_call.1} parent=0
    #allocation2 [shape = 'u8[98304]{0}', space=vmem, size = 0x18000, scoped, tag = 'input window, operand 3, single buffered']
    #allocation3 [shape = 's32[2]{0}', space=sflag, size = 0x8, scoped, tag = 'scoped memory for tpu_custom_call.1']
    #allocation4 [shape = 's32[2]{0}', space=sflag, size = 0x8, scoped, tag = 'scoped memory for tpu_custom_call.1']
    #allocation5 [shape = 'u8[8192]{0}', space=vmem, size = 0x2000, scoped, tag = 'output window, operand 0']
    %10 = vsyncpa [#allocation3], 0
    %11 = vsyncpa [#allocation4], 0
    %s12 = scalar_lea.sflag [#allocation4], 1
    %13 = vsyncpa %s12, 0
    loop: start=0, step=1, limit=4
    $region2: #{tpu_custom_call.1} parent=1 // loop_pre_header
      _
    $region3: #{tpu_custom_call.1} parent=1 // loop_header
      %s15 = sphi 0, %s19
      %p16 = scmp.ge.s32.totalorder %s15, 4
      %s25 = sphi 0, %s27
      %s28 = sphi 0, %s25
      %s29 = sphi 0, %s28
      %s45 = sphi 0, %s29
      %s49 = sphi 0, %s49
      %s51 = sphi 0, %s49
      %s52 = sphi 0, %s51
      %s66 = sphi 0, %s52
      %s70 = sphi 0, %s70
      %s72 = sphi 0, %s70
      %s73 = sphi 0, %s72
      %s87 = sphi 0, %s73
      %s91 = sphi 0, %s91
      %s93 = sphi 0, %s91
      %s94 = sphi 0, %s93
      %s108 = sphi 0, %s94
      %s112 = sphi 0, %s112
      %s114 = sphi 0, %s112
      %s115 = sphi 0, %s114
      %s129 = sphi 0, %s115
      %s135 = sphi 0, %s137
      %s138 = sphi 0, %s135
      %s139 = sphi 0, %s138
      %s155 = sphi 0, %s139
    $region4: #{tpu_custom_call.1} parent=1 // loop_header_branch
      %18 = sbr.rel (%p16) target = $region8
    $region5: #{tpu_custom_call.1} parent=1 // loop_body
      %s20 = ssub.s32 %s15, 1
      %s21 = ssub.s32 %s15, 2
      %s22 = sadd.s32 %s15, 1
      %s23 = ssub.s32 %s15, %s22
      %p24 = scmp.eq.s32.totalorder %s23, 0
      %s26 = sadd.s32 %s25, 1
      %s27 = scalar_select %p24, %s25, %s26
      %p30 = pneg %p24
      %p31 = scmp.eq.s32.totalorder %s15, 1
      %p32 = por %p30, %p31
      %p33 = scmp.ne.s32.totalorder %s25, %s28
      %p34 = scmp.eq.s32.totalorder %s15, 0
      %p35 = por %p33, %p34
      %p36 = scmp.ne.s32.totalorder %s25, %s28
      %p37 = scmp.eq.s32.totalorder %s20, 1
      %p38 = por %p36, %p37
      %p39 = scmp.ne.s32.totalorder %s28, %s29
      %p40 = scmp.eq.s32.totalorder %s20, 0
      %p41 = por %p39, %p40
      %p42 = scmp.ne.s32.totalorder %s28, %s29
      %p43 = scmp.eq.s32.totalorder %s21, 1
      %p44 = por %p42, %p43
      %p46 = scmp.ne.s32.totalorder %s29, %s45
      %p47 = scmp.eq.s32.totalorder %s21, 0
      %p48 = por %p46, %p47
      %s50 = sadd.s32 %s49, 1
      %p53 = scmp.eq.s32.totalorder %s15, 1
      %p54 = scmp.ne.s32.totalorder %s49, %s51
      %p55 = scmp.eq.s32.totalorder %s15, 0
      %p56 = por %p54, %p55
      %p57 = scmp.ne.s32.totalorder %s49, %s51
      %p58 = scmp.eq.s32.totalorder %s20, 1
      %p59 = por %p57, %p58
      %p60 = scmp.ne.s32.totalorder %s51, %s52
      %p61 = scmp.eq.s32.totalorder %s20, 0
      %p62 = por %p60, %p61
      %p63 = scmp.ne.s32.totalorder %s51, %s52
      %p64 = scmp.eq.s32.totalorder %s21, 1
      %p65 = por %p63, %p64
      %p67 = scmp.ne.s32.totalorder %s52, %s66
      %p68 = scmp.eq.s32.totalorder %s21, 0
      %p69 = por %p67, %p68
      %s71 = sadd.s32 %s70, 1
      %p74 = scmp.eq.s32.totalorder %s15, 1
      %p75 = scmp.ne.s32.totalorder %s70, %s72
      %p76 = scmp.eq.s32.totalorder %s15, 0
      %p77 = por %p75, %p76
      %p78 = scmp.ne.s32.totalorder %s70, %s72
      %p79 = scmp.eq.s32.totalorder %s20, 1
      %p80 = por %p78, %p79
      %p81 = scmp.ne.s32.totalorder %s72, %s73
      %p82 = scmp.eq.s32.totalorder %s20, 0
      %p83 = por %p81, %p82
      %p84 = scmp.ne.s32.totalorder %s72, %s73
      %p85 = scmp.eq.s32.totalorder %s21, 1
      %p86 = por %p84, %p85
      %p88 = scmp.ne.s32.totalorder %s73, %s87
      %p89 = scmp.eq.s32.totalorder %s21, 0
      %p90 = por %p88, %p89
      %s92 = sadd.s32 %s91, 1
      %p95 = scmp.eq.s32.totalorder %s15, 1
      %p96 = scmp.ne.s32.totalorder %s91, %s93
      %p97 = scmp.eq.s32.totalorder %s15, 0
      %p98 = por %p96, %p97
      %p99 = scmp.ne.s32.totalorder %s91, %s93
      %p100 = scmp.eq.s32.totalorder %s20, 1
      %p101 = por %p99, %p100
      %p102 = scmp.ne.s32.totalorder %s93, %s94
      %p103 = scmp.eq.s32.totalorder %s20, 0
      %p104 = por %p102, %p103
      %p105 = scmp.ne.s32.totalorder %s93, %s94
      %p106 = scmp.eq.s32.totalorder %s21, 1
      %p107 = por %p105, %p106
      %p109 = scmp.ne.s32.totalorder %s94, %s108
      %p110 = scmp.eq.s32.totalorder %s21, 0
      %p111 = por %p109, %p110
      %s113 = sadd.s32 %s112, 1
      %p116 = scmp.eq.s32.totalorder %s15, 1
      %p117 = scmp.ne.s32.totalorder %s112, %s114
      %p118 = scmp.eq.s32.totalorder %s15, 0
      %p119 = por %p117, %p118
      %p120 = scmp.ne.s32.totalorder %s112, %s114
      %p121 = scmp.eq.s32.totalorder %s20, 1
      %p122 = por %p120, %p121
      %p123 = scmp.ne.s32.totalorder %s114, %s115
      %p124 = scmp.eq.s32.totalorder %s20, 0
      %p125 = por %p123, %p124
      %p126 = scmp.ne.s32.totalorder %s114, %s115
      %p127 = scmp.eq.s32.totalorder %s21, 1
      %p128 = por %p126, %p127
      %p130 = scmp.ne.s32.totalorder %s115, %s129
      %p131 = scmp.eq.s32.totalorder %s21, 0
      %p132 = por %p130, %p131
      %s133 = ssub.s32 %s15, %s22
      %p134 = scmp.eq.s32.totalorder %s133, 0
      %s136 = sadd.s32 %s135, 1
      %s137 = scalar_select %p134, %s135, %s136
      %p140 = pneg %p134
      %p141 = scmp.eq.s32.totalorder %s15, 1
      %p142 = por %p140, %p141
      %p143 = scmp.ne.s32.totalorder %s135, %s138
      %p144 = scmp.eq.s32.totalorder %s15, 0
      %p145 = por %p143, %p144
      %p146 = scmp.ne.s32.totalorder %s135, %s138
      %p147 = scmp.eq.s32.totalorder %s20, 1
      %p148 = por %p146, %p147
      %p149 = scmp.ne.s32.totalorder %s138, %s139
      %p150 = scmp.eq.s32.totalorder %s20, 0
      %p151 = por %p149, %p150
      %p152 = scmp.ne.s32.totalorder %s138, %s139
      %p153 = scmp.eq.s32.totalorder %s21, 1
      %p154 = por %p152, %p153
      %p156 = scmp.ne.s32.totalorder %s139, %s155
      %p157 = scmp.eq.s32.totalorder %s21, 0
      %p158 = por %p156, %p157
      %p159 = scmp.le.s32.totalorder 1, %s15
      %p160 = scmp.lt.s32.totalorder %s15, 3
      %p161 = pnand %p159, %p160
      %p162 = pneg %p161
      // Predicated region
      $region9: #{tpu_custom_call.1} parent=5 // pred_check
        _
      $region10: #{tpu_custom_call.1} parent=5 // pred_check_branch
        %164 = sbr.rel (%p161) target = $region12
      $region11: #{tpu_custom_call.1} parent=5 // pred_region
        %s165 = ssub.s32 %s15, 1
        // Predicated region
        $region13: #{tpu_custom_call.1} parent=11 // pred_check
          %p166 = pneg %p62
        $region14: #{tpu_custom_call.1} parent=11 // pred_check_branch
          %168 = sbr.rel (%p166) target = $region16
        $region15: #{tpu_custom_call.1} parent=11 // pred_region
          _
        $region16: #{tpu_custom_call.1} parent=11 // pred_fallthru
          _
        // Predicated region
        $region17: #{tpu_custom_call.1} parent=11 // pred_check
          %p169 = pneg %p83
        $region18: #{tpu_custom_call.1} parent=11 // pred_check_branch
          %171 = sbr.rel (%p169) target = $region20
        $region19: #{tpu_custom_call.1} parent=11 // pred_region
          _
        $region20: #{tpu_custom_call.1} parent=11 // pred_fallthru
          _
        // Predicated region
        $region21: #{tpu_custom_call.1} parent=11 // pred_check
          %p172 = pneg %p104
        $region22: #{tpu_custom_call.1} parent=11 // pred_check_branch
          %174 = sbr.rel (%p172) target = $region24
        $region23: #{tpu_custom_call.1} parent=11 // pred_region
          %s176 = ssub.s32 3072, 3072
          %177 = vsyncadd [#allocation3], %s176
          %s178 = sshll.u32 [#allocation2], 4
          %s179 = int_to_ptr.vmem [resolvable:$true] %s178
          %184 = dma.hbm_to_vmem [thread:$0]  %s3, 3072, %s179, [#allocation3], 64, 64, 4
        $region24: #{tpu_custom_call.1} parent=11 // pred_fallthru
          _
        // Predicated region
        $region25: #{tpu_custom_call.1} parent=11 // pred_check
          %p185 = pneg %p125
        $region26: #{tpu_custom_call.1} parent=11 // pred_check_branch
          %187 = sbr.rel (%p185) target = $region28
        $region27: #{tpu_custom_call.1} parent=11 // pred_region
          _
        $region28: #{tpu_custom_call.1} parent=11 // pred_fallthru
          _
      $region12: #{tpu_custom_call.1} parent=5 // pred_fallthru
        _
      %p188 = scmp.lt.s32.totalorder %s15, 2
      // Predicated region
      $region29: #{tpu_custom_call.1} parent=5 // pred_check
        %p189 = pneg %p188
      $region30: #{tpu_custom_call.1} parent=5 // pred_check_branch
        %191 = sbr.rel (%p189) target = $region32
      $region31: #{tpu_custom_call.1} parent=5 // pred_region
        // Predicated region
        $region33: #{tpu_custom_call.1} parent=31 // pred_check
          %p192 = pneg %p35
        $region34: #{tpu_custom_call.1} parent=31 // pred_check_branch
          %194 = sbr.rel (%p192) target = $region36
        $region35: #{tpu_custom_call.1} parent=31 // pred_region
          %p195 = scmp.lt.s32.totalorder %s15, 1
          %s196 = scalar_select %p195, %s15, 1
          %s197 = smul.addr %s196, 3
          %s198 = smul.addr %s197, 4
          %s199 = scalar_lea.vmem %s0, %s198
        $region36: #{tpu_custom_call.1} parent=31 // pred_fallthru
          _
      $region32: #{tpu_custom_call.1} parent=5 // pred_fallthru
        _
      %p200 = scmp.le.s32.totalorder 1, %s15
      %p201 = scmp.lt.s32.totalorder %s15, 3
      %p202 = pnand %p200, %p201
      %p203 = pneg %p202
      // Predicated region
      $region37: #{tpu_custom_call.1} parent=5 // pred_check
        _
      $region38: #{tpu_custom_call.1} parent=5 // pred_check_branch
        %205 = sbr.rel (%p202) target = $region40
      $region39: #{tpu_custom_call.1} parent=5 // pred_region
        %s206 = ssub.s32 %s15, 1
        // Predicated region
        $region41: #{tpu_custom_call.1} parent=39 // pred_check
          %p207 = pneg %p104
        $region42: #{tpu_custom_call.1} parent=39 // pred_check_branch
          %209 = sbr.rel (%p207) target = $region44
        $region43: #{tpu_custom_call.1} parent=39 // pred_region
          %210 = dma.done [#allocation3], 3072
        $region44: #{tpu_custom_call.1} parent=39 // pred_fallthru
          _
        %p211 = scmp.lt.s32.totalorder %s20, 1
        %s212 = scalar_select %p211, %s20, 1
        %s213 = smul.addr %s212, 3
        %s214 = smul.addr %s213, 4
        %s215 = scalar_lea.vmem %s0, %s214
        %p216 = pneg %p41
        %p217 = pneg %p38
        %p218 = pneg %p62
        %p219 = pneg %p59
        %p220 = pneg %p83
        %p221 = pneg %p80
        %p222 = pneg %p104
        %p223 = pneg %p101
        %p224 = pneg %p125
        %p225 = pneg %p122
        %p226 = pneg %p151
        %p227 = pneg %p148
        %s228 = sand.u32 %s138, 1
        %s229 = scalar_lea.sflag [#allocation4], %s228
        %s230 = sand.u32 %s138, 1
        %s231 = smul.addr %s230, 8
        %s232 = scalar_lea.vmem [#allocation5], %s231
        %p233 = scmp.lt.s32.totalorder %s20, 1
        %s234 = scalar_select %p233, %s20, 1
        %s235 = smul.addr %s234, 3
        %s236 = smul.addr %s235, 4
        %s237 = scalar_lea.vmem %s0, %s236
        %v239 = vld [vmem:[%s237] sm:$0xf]
        %v240 = vld [vmem:[%s237 + $0x4] sm:$0xf]
        %v241 = vld [vmem:[%s237 + $0x8] sm:$0x1]
        %v242 = vld [vmem:[%s1] sm:$0x3]
        %s243 = scalar_lea.vmem %s1, 2
        %v244 = vld [vmem:[%s243] sm:$0x3]
        %v248 = vunpack.c.l.b16 %v239
        %v249 = vunpack.c.l.b16 %v240
        %v250 = vunpack.c.l.b16 %v241
        %v251 = vpack.c.b16 %v249, %v248
        %v252 = vpack.c.b16 %v250, %v250
        %vm253 = vsmask.f32 7424
        %v255 = vshrl.u32 %v251, 16
        %v257 = vshll.u32 %v251, 16
        %v259 = vrot.slane %v257, 1
        %v260 = vor.u32 %v255, %v259
        %v262 = vshll.u32 %v252, 16
        %v264 = vrot.slane %v262, 1
        %v265 = vsel %vm253, %v260, %v264
        %vm266 = vcmask 31744
        %v268 = vsel %vm266, %v265, 0
        %vm270 = vcmask 1041408
        %v272 = vsel %vm270, %v244, 0
        %274 = vmatprep.subr.bf16.mxu0 0
        %275 = vmatpush1.bf16.msra.mxu0 %v272
        %276 = vmatprep.subr.bf16.mxu0 0
        %277 = vmatpush1.bf16.msra.mxu0 0
        %278 = vmatprep.subr.bf16.mxu0 0
        %279 = vmatpush1.bf16.msra.mxu0 0
        %280 = vmatprep.subr.bf16.mxu0 0
        %281 = vmatpush1.bf16.msra.mxu0 0
        %282 = vmatprep.subr.bf16.mxu0 0
        %283 = vmatpush1.bf16.msra.mxu0 0
        %284 = vmatprep.subr.bf16.mxu0 0
        %285 = vmatpush1.bf16.msra.mxu0 0
        %286 = vmatprep.subr.bf16.mxu0 0
        %287 = vmatpush1.bf16.msra.mxu0 0
        %288 = vmatprep.subr.bf16.mxu0 0
        %289 = vmatpush1.bf16.msra.mxu0 0
        %290 = vmatprep.subr.bf16.mxu0 0
        %291 = vmatpush1.bf16.msra.mxu0 0
        %292 = vmatprep.subr.bf16.mxu0 0
        %293 = vmatpush1.bf16.msra.mxu0 0
        %294 = vmatprep.subr.bf16.mxu0 0
        %295 = vmatpush1.bf16.msra.mxu0 0
        %296 = vmatprep.subr.bf16.mxu0 0
        %297 = vmatpush1.bf16.msra.mxu0 0
        %298 = vmatprep.subr.bf16.mxu0 0
        %299 = vmatpush1.bf16.msra.mxu0 0
        %300 = vmatprep.subr.bf16.mxu0 0
        %301 = vmatpush1.bf16.msra.mxu0 0
        %302 = vmatprep.subr.bf16.mxu0 0
        %303 = vmatpush1.bf16.msra.mxu0 0
        %304 = vmatprep.subr.bf16.mxu0 0
        %305 = vmatpush1.bf16.msra.mxu0 0
        %306 = vmatprep.mubr.bf16.mxu0 0
        %307 = vmatmul.mubr.bf16.gmra.mrb[0].mxu0 %v268
        %v308 = vpop.f32.mrb[0].mxu0
        %v309 = vadd.f32 0.0, %v308
        %v310 = vpop.f32.mrb[0].mxu0
        %v311 = vpop.f32.mrb[0].mxu0
        %v312 = vadd.f32 0.0, %v311
        %v313 = vpop.f32.mrb[0].mxu0
        %314 = vdwg.mxu0
        %v315 = vsel %vm266, %v251, 0
        %v318 = vsel %vm270, %v242, 0
        %320 = vmatprep.subr.bf16.mxu0 0
        %321 = vmatpush1.bf16.msra.mxu0 %v318
        %322 = vmatprep.subr.bf16.mxu0 0
        %323 = vmatpush1.bf16.msra.mxu0 0
        %324 = vmatprep.subr.bf16.mxu0 0
        %325 = vmatpush1.bf16.msra.mxu0 0
        %326 = vmatprep.subr.bf16.mxu0 0
        %327 = vmatpush1.bf16.msra.mxu0 0
        %328 = vmatprep.subr.bf16.mxu0 0
        %329 = vmatpush1.bf16.msra.mxu0 0
        %330 = vmatprep.subr.bf16.mxu0 0
        %331 = vmatpush1.bf16.msra.mxu0 0
        %332 = vmatprep.subr.bf16.mxu0 0
        %333 = vmatpush1.bf16.msra.mxu0 0
        %334 = vmatprep.subr.bf16.mxu0 0
        %335 = vmatpush1.bf16.msra.mxu0 0
        %336 = vmatprep.subr.bf16.mxu0 0
        %337 = vmatpush1.bf16.msra.mxu0 0
        %338 = vmatprep.subr.bf16.mxu0 0
        %339 = vmatpush1.bf16.msra.mxu0 0
        %340 = vmatprep.subr.bf16.mxu0 0
        %341 = vmatpush1.bf16.msra.mxu0 0
        %342 = vmatprep.subr.bf16.mxu0 0
        %343 = vmatpush1.bf16.msra.mxu0 0
        %344 = vmatprep.subr.bf16.mxu0 0
        %345 = vmatpush1.bf16.msra.mxu0 0
        %346 = vmatprep.subr.bf16.mxu0 0
        %347 = vmatpush1.bf16.msra.mxu0 0
        %348 = vmatprep.subr.bf16.mxu0 0
        %349 = vmatpush1.bf16.msra.mxu0 0
        %350 = vmatprep.subr.bf16.mxu0 0
        %351 = vmatpush1.bf16.msra.mxu0 0
        %352 = vmatprep.mubr.bf16.mxu0 0
        %353 = vmatmul.mubr.bf16.gmra.mrb[0].mxu0 %v315
        %v354 = vpop.f32.mrb[0].mxu0
        %v355 = vadd.f32 %v309, %v354
        %v356 = vpop.f32.mrb[0].mxu0
        %v357 = vpop.f32.mrb[0].mxu0
        %v358 = vadd.f32 %v312, %v357
        %v359 = vpop.f32.mrb[0].mxu0
        %360 = vdwg.mxu0
        %s361 = scalar_lea.vmem %s1, 4
        %v362 = vld [vmem:[%s361] sm:$0x3]
        %vm363 = vcmask 1046528
        %v364 = vrot.slane %v251, 1
        %v365 = vrot.slane %v252, 1
        %v366 = vsel %vm363, %v364, %v365
        %v368 = vsel %vm266, %v366, 0
        %v371 = vsel %vm270, %v362, 0
        %373 = vmatprep.subr.bf16.mxu0 0
        %374 = vmatpush1.bf16.msra.mxu0 %v371
        %375 = vmatprep.subr.bf16.mxu0 0
        %376 = vmatpush1.bf16.msra.mxu0 0
        %377 = vmatprep.subr.bf16.mxu0 0
        %378 = vmatpush1.bf16.msra.mxu0 0
        %379 = vmatprep.subr.bf16.mxu0 0
        %380 = vmatpush1.bf16.msra.mxu0 0
        %381 = vmatprep.subr.bf16.mxu0 0
        %382 = vmatpush1.bf16.msra.mxu0 0
        %383 = vmatprep.subr.bf16.mxu0 0
        %384 = vmatpush1.bf16.msra.mxu0 0
        %385 = vmatprep.subr.bf16.mxu0 0
        %386 = vmatpush1.bf16.msra.mxu0 0
        %387 = vmatprep.subr.bf16.mxu0 0
        %388 = vmatpush1.bf16.msra.mxu0 0
        %389 = vmatprep.subr.bf16.mxu0 0
        %390 = vmatpush1.bf16.msra.mxu0 0
        %391 = vmatprep.subr.bf16.mxu0 0
        %392 = vmatpush1.bf16.msra.mxu0 0
        %393 = vmatprep.subr.bf16.mxu0 0
        %394 = vmatpush1.bf16.msra.mxu0 0
        %395 = vmatprep.subr.bf16.mxu0 0
        %396 = vmatpush1.bf16.msra.mxu0 0
        %397 = vmatprep.subr.bf16.mxu0 0
        %398 = vmatpush1.bf16.msra.mxu0 0
        %399 = vmatprep.subr.bf16.mxu0 0
        %400 = vmatpush1.bf16.msra.mxu0 0
        %401 = vmatprep.subr.bf16.mxu0 0
        %402 = vmatpush1.bf16.msra.mxu0 0
        %403 = vmatprep.subr.bf16.mxu0 0
        %404 = vmatpush1.bf16.msra.mxu0 0
        %405 = vmatprep.mubr.bf16.mxu0 0
        %406 = vmatmul.mubr.bf16.gmra.mrb[0].mxu0 %v368
        %v407 = vpop.f32.mrb[0].mxu0
        %v408 = vadd.f32 0.0, %v407
        %v409 = vpop.f32.mrb[0].mxu0
        %v410 = vpop.f32.mrb[0].mxu0
        %v411 = vadd.f32 0.0, %v410
        %v412 = vpop.f32.mrb[0].mxu0
        %413 = vdwg.mxu0
        %v414 = vadd.f32 %v355, %v408
        %v415 = vadd.f32 %v358, %v411
        %v416 = vld [vmem:[%s2] sm:$0x1]
        %v418 = vlaneseq
        %v419 = vshrl.u32 %v418, 7
        %v420 = vsub.s32 0, %v419
        %v421 = vrot.slane %v416, %v420
        %v423 = vadd.f32 %v414, %v421
        %v424 = vadd.f32 %v415, %v421
        %v425 = vmax.f32 %v423, 0.0
        %v426 = vmax.f32 %v424, 0.0
        %v427 = vpack.c.bf16 %v426, %v425
        %v429 = vshrl.u32 %v427, 16
        %v431 = vrot.slane %v429, 7
        %v432 = vshll.u32 %v427, 16
        %v434 = vor.u32 %v431, %v432
        %vm437 = vcmask 1040384
        %vm438 = vsmask.f32 256
        %vm439 = vmand %vm437, %vm438
        %v440 = vsel %vm439, 0, %v434
        %v441 = vsel %vm439, %v431, 0
        %v442 = vld [vmem:[#allocation2] sm:$0xf]
        %v443 = vld [vmem:[#allocation2 + $0x4] sm:$0xf]
        %v444 = vld [vmem:[#allocation2 + $0x8] sm:$0xf]
        %v445 = vld [vmem:[#allocation2 + $0xc] sm:$0xf]
        %v446 = vld [vmem:[#allocation2 + $0x10] sm:$0xf]
        %v447 = vld [vmem:[#allocation2 + $0x14] sm:$0xf]
        %v448 = vld [vmem:[#allocation2 + $0x18] sm:$0xf]
        %v449 = vld [vmem:[#allocation2 + $0x1c] sm:$0xf]
        %v450 = vld [vmem:[#allocation2 + $0x20] sm:$0xf]
        %v451 = vld [vmem:[#allocation2 + $0x24] sm:$0xf]
        %v452 = vld [vmem:[#allocation2 + $0x28] sm:$0xf]
        %v453 = vld [vmem:[#allocation2 + $0x2c] sm:$0xf]
        %v454 = vld [vmem:[#allocation2 + $0x30] sm:$0xf]
        %v455 = vld [vmem:[#allocation2 + $0x34] sm:$0xf]
        %v456 = vld [vmem:[#allocation2 + $0x38] sm:$0xf]
        %v457 = vld [vmem:[#allocation2 + $0x3c] sm:$0xf]
        %s458 = scalar_lea.vmem [#allocation2], 64
        %v459 = vld [vmem:[%s458] sm:$0xf]
        %v460 = vld [vmem:[%s458 + $0x4] sm:$0xf]
        %v461 = vld [vmem:[%s458 + $0x8] sm:$0xf]
        %v462 = vld [vmem:[%s458 + $0xc] sm:$0xf]
        %v463 = vld [vmem:[%s458 + $0x10] sm:$0xf]
        %v464 = vld [vmem:[%s458 + $0x14] sm:$0xf]
        %v465 = vld [vmem:[%s458 + $0x18] sm:$0xf]
        %v466 = vld [vmem:[%s458 + $0x1c] sm:$0xf]
        %v467 = vld [vmem:[%s458 + $0x20] sm:$0xf]
        %v468 = vld [vmem:[%s458 + $0x24] sm:$0xf]
        %v469 = vld [vmem:[%s458 + $0x28] sm:$0xf]
        %v470 = vld [vmem:[%s458 + $0x2c] sm:$0xf]
        %v471 = vld [vmem:[%s458 + $0x30] sm:$0xf]
        %v472 = vld [vmem:[%s458 + $0x34] sm:$0xf]
        %v473 = vld [vmem:[%s458 + $0x38] sm:$0xf]
        %v474 = vld [vmem:[%s458 + $0x3c] sm:$0xf]
        %v476 = vshrl.u32 %v440, 16
        %v478 = vshll.u32 %v440, 16
        %v480 = vrot.slane %v478, 1
        %v481 = vor.u32 %v476, %v480
        %v483 = vshll.u32 %v441, 16
        %v485 = vrot.slane %v483, 1
        %v486 = vsel %vm253, %v481, %v485
        %v504 = vunpack.c.l.b16 %v459
        %v505 = vunpack.c.l.b16 %v460
        %v506 = vunpack.c.l.b16 %v461
        %v507 = vunpack.c.l.b16 %v462
        %v508 = vunpack.c.l.b16 %v463
        %v509 = vunpack.c.l.b16 %v464
        %v510 = vunpack.c.l.b16 %v465
        %v511 = vunpack.c.l.b16 %v466
        %v512 = vunpack.c.l.b16 %v467
        %v513 = vunpack.c.l.b16 %v468
        %v514 = vunpack.c.l.b16 %v469
        %v515 = vunpack.c.l.b16 %v470
        %v516 = vunpack.c.l.b16 %v471
        %v517 = vunpack.c.l.b16 %v472
        %v518 = vunpack.c.l.b16 %v473
        %v519 = vunpack.c.l.b16 %v474
        %v520 = vpack.c.b16 %v505, %v504
        %v521 = vpack.c.b16 %v507, %v506
        %v522 = vpack.c.b16 %v509, %v508
        %v523 = vpack.c.b16 %v511, %v510
        %v524 = vpack.c.b16 %v513, %v512
        %v525 = vpack.c.b16 %v515, %v514
        %v526 = vpack.c.b16 %v517, %v516
        %v527 = vpack.c.b16 %v519, %v518
        %536 = vmatprep.subr.bf16.mxu0 0
        %537 = vmatpush1.bf16.msra.mxu0 %v520
        %538 = vmatprep.subr.bf16.mxu0 0
        %539 = vmatpush1.bf16.msra.mxu0 %v521
        %540 = vmatprep.subr.bf16.mxu0 0
        %541 = vmatpush1.bf16.msra.mxu0 %v522
        %542 = vmatprep.subr.bf16.mxu0 0
        %543 = vmatpush1.bf16.msra.mxu0 %v523
        %544 = vmatprep.subr.bf16.mxu0 0
        %545 = vmatpush1.bf16.msra.mxu0 %v524
        %546 = vmatprep.subr.bf16.mxu0 0
        %547 = vmatpush1.bf16.msra.mxu0 %v525
        %548 = vmatprep.subr.bf16.mxu0 0
        %549 = vmatpush1.bf16.msra.mxu0 %v526
        %550 = vmatprep.subr.bf16.mxu0 0
        %551 = vmatpush1.bf16.msra.mxu0 %v527
        %552 = vmatprep.subr.bf16.mxu0 0
        %553 = vmatpush1.bf16.msra.mxu0 0
        %554 = vmatprep.subr.bf16.mxu0 0
        %555 = vmatpush1.bf16.msra.mxu0 0
        %556 = vmatprep.subr.bf16.mxu0 0
        %557 = vmatpush1.bf16.msra.mxu0 0
        %558 = vmatprep.subr.bf16.mxu0 0
        %559 = vmatpush1.bf16.msra.mxu0 0
        %560 = vmatprep.subr.bf16.mxu0 0
        %561 = vmatpush1.bf16.msra.mxu0 0
        %562 = vmatprep.subr.bf16.mxu0 0
        %563 = vmatpush1.bf16.msra.mxu0 0
        %564 = vmatprep.subr.bf16.mxu0 0
        %565 = vmatpush1.bf16.msra.mxu0 0
        %566 = vmatprep.subr.bf16.mxu0 0
        %567 = vmatpush1.bf16.msra.mxu0 0
        %568 = vmatprep.mubr.bf16.mxu0 0
        %569 = vmatmul.mubr.bf16.gmra.mrb[0].mxu0 %v486
        %v570 = vpop.f32.mrb[0].mxu0
        %v571 = vadd.f32 0.0, %v570
        %v572 = vpop.f32.mrb[0].mxu0
        %v573 = vpop.f32.mrb[0].mxu0
        %v574 = vadd.f32 0.0, %v573
        %v575 = vpop.f32.mrb[0].mxu0
        %576 = vdwg.mxu0
        %v593 = vunpack.c.l.b16 %v442
        %v594 = vunpack.c.l.b16 %v443
        %v595 = vunpack.c.l.b16 %v444
        %v596 = vunpack.c.l.b16 %v445
        %v597 = vunpack.c.l.b16 %v446
        %v598 = vunpack.c.l.b16 %v447
        %v599 = vunpack.c.l.b16 %v448
        %v600 = vunpack.c.l.b16 %v449
        %v601 = vunpack.c.l.b16 %v450
        %v602 = vunpack.c.l.b16 %v451
        %v603 = vunpack.c.l.b16 %v452
        %v604 = vunpack.c.l.b16 %v453
        %v605 = vunpack.c.l.b16 %v454
        %v606 = vunpack.c.l.b16 %v455
        %v607 = vunpack.c.l.b16 %v456
        %v608 = vunpack.c.l.b16 %v457
        %v609 = vpack.c.b16 %v594, %v593
        %v610 = vpack.c.b16 %v596, %v595
        %v611 = vpack.c.b16 %v598, %v597
        %v612 = vpack.c.b16 %v600, %v599
        %v613 = vpack.c.b16 %v602, %v601
        %v614 = vpack.c.b16 %v604, %v603
        %v615 = vpack.c.b16 %v606, %v605
        %v616 = vpack.c.b16 %v608, %v607
        %625 = vmatprep.subr.bf16.mxu0 0
        %626 = vmatpush1.bf16.msra.mxu0 %v609
        %627 = vmatprep.subr.bf16.mxu0 0
        %628 = vmatpush1.bf16.msra.mxu0 %v610
        %629 = vmatprep.subr.bf16.mxu0 0
        %630 = vmatpush1.bf16.msra.mxu0 %v611
        %631 = vmatprep.subr.bf16.mxu0 0
        %632 = vmatpush1.bf16.msra.mxu0 %v612
        %633 = vmatprep.subr.bf16.mxu0 0
        %634 = vmatpush1.bf16.msra.mxu0 %v613
        %635 = vmatprep.subr.bf16.mxu0 0
        %636 = vmatpush1.bf16.msra.mxu0 %v614
        %637 = vmatprep.subr.bf16.mxu0 0
        %638 = vmatpush1.bf16.msra.mxu0 %v615
        %639 = vmatprep.subr.bf16.mxu0 0
        %640 = vmatpush1.bf16.msra.mxu0 %v616
        %641 = vmatprep.subr.bf16.mxu0 0
        %642 = vmatpush1.bf16.msra.mxu0 0
        %643 = vmatprep.subr.bf16.mxu0 0
        %644 = vmatpush1.bf16.msra.mxu0 0
        %645 = vmatprep.subr.bf16.mxu0 0
        %646 = vmatpush1.bf16.msra.mxu0 0
        %647 = vmatprep.subr.bf16.mxu0 0
        %648 = vmatpush1.bf16.msra.mxu0 0
        %649 = vmatprep.subr.bf16.mxu0 0
        %650 = vmatpush1.bf16.msra.mxu0 0
        %651 = vmatprep.subr.bf16.mxu0 0
        %652 = vmatpush1.bf16.msra.mxu0 0
        %653 = vmatprep.subr.bf16.mxu0 0
        %654 = vmatpush1.bf16.msra.mxu0 0
        %655 = vmatprep.subr.bf16.mxu0 0
        %656 = vmatpush1.bf16.msra.mxu0 0
        %657 = vmatprep.mubr.bf16.mxu0 0
        %658 = vmatmul.mubr.bf16.gmra.mrb[0].mxu0 %v440
        %v659 = vpop.f32.mrb[0].mxu0
        %v660 = vadd.f32 %v571, %v659
        %v661 = vpop.f32.mrb[0].mxu0
        %v662 = vpop.f32.mrb[0].mxu0
        %v663 = vadd.f32 %v574, %v662
        %v664 = vpop.f32.mrb[0].mxu0
        %665 = vdwg.mxu0
        %s666 = scalar_lea.vmem [#allocation2], 128
        %v667 = vld [vmem:[%s666] sm:$0xf]
        %v668 = vld [vmem:[%s666 + $0x4] sm:$0xf]
        %v669 = vld [vmem:[%s666 + $0x8] sm:$0xf]
        %v670 = vld [vmem:[%s666 + $0xc] sm:$0xf]
        %v671 = vld [vmem:[%s666 + $0x10] sm:$0xf]
        %v672 = vld [vmem:[%s666 + $0x14] sm:$0xf]
        %v673 = vld [vmem:[%s666 + $0x18] sm:$0xf]
        %v674 = vld [vmem:[%s666 + $0x1c] sm:$0xf]
        %v675 = vld [vmem:[%s666 + $0x20] sm:$0xf]
        %v676 = vld [vmem:[%s666 + $0x24] sm:$0xf]
        %v677 = vld [vmem:[%s666 + $0x28] sm:$0xf]
        %v678 = vld [vmem:[%s666 + $0x2c] sm:$0xf]
        %v679 = vld [vmem:[%s666 + $0x30] sm:$0xf]
        %v680 = vld [vmem:[%s666 + $0x34] sm:$0xf]
        %v681 = vld [vmem:[%s666 + $0x38] sm:$0xf]
        %v682 = vld [vmem:[%s666 + $0x3c] sm:$0xf]
        %v685 = vrot.slane %v440, 1
        %v686 = vrot.slane %v441, 1
        %v687 = vsel %vm363, %v685, %v686
        %v705 = vunpack.c.l.b16 %v667
        %v706 = vunpack.c.l.b16 %v668
        %v707 = vunpack.c.l.b16 %v669
        %v708 = vunpack.c.l.b16 %v670
        %v709 = vunpack.c.l.b16 %v671
        %v710 = vunpack.c.l.b16 %v672
        %v711 = vunpack.c.l.b16 %v673
        %v712 = vunpack.c.l.b16 %v674
        %v713 = vunpack.c.l.b16 %v675
        %v714 = vunpack.c.l.b16 %v676
        %v715 = vunpack.c.l.b16 %v677
        %v716 = vunpack.c.l.b16 %v678
        %v717 = vunpack.c.l.b16 %v679
        %v718 = vunpack.c.l.b16 %v680
        %v719 = vunpack.c.l.b16 %v681
        %v720 = vunpack.c.l.b16 %v682
        %v721 = vpack.c.b16 %v706, %v705
        %v722 = vpack.c.b16 %v708, %v707
        %v723 = vpack.c.b16 %v710, %v709
        %v724 = vpack.c.b16 %v712, %v711
        %v725 = vpack.c.b16 %v714, %v713
        %v726 = vpack.c.b16 %v716, %v715
        %v727 = vpack.c.b16 %v718, %v717
        %v728 = vpack.c.b16 %v720, %v719
        %737 = vmatprep.subr.bf16.mxu0 0
        %738 = vmatpush1.bf16.msra.mxu0 %v721
        %739 = vmatprep.subr.bf16.mxu0 0
        %740 = vmatpush1.bf16.msra.mxu0 %v722
        %741 = vmatprep.subr.bf16.mxu0 0
        %742 = vmatpush1.bf16.msra.mxu0 %v723
        %743 = vmatprep.subr.bf16.mxu0 0
        %744 = vmatpush1.bf16.msra.mxu0 %v724
        %745 = vmatprep.subr.bf16.mxu0 0
        %746 = vmatpush1.bf16.msra.mxu0 %v725
        %747 = vmatprep.subr.bf16.mxu0 0
        %748 = vmatpush1.bf16.msra.mxu0 %v726
        %749 = vmatprep.subr.bf16.mxu0 0
        %750 = vmatpush1.bf16.msra.mxu0 %v727
        %751 = vmatprep.subr.bf16.mxu0 0
        %752 = vmatpush1.bf16.msra.mxu0 %v728
        %753 = vmatprep.subr.bf16.mxu0 0
        %754 = vmatpush1.bf16.msra.mxu0 0
        %755 = vmatprep.subr.bf16.mxu0 0
        %756 = vmatpush1.bf16.msra.mxu0 0
        %757 = vmatprep.subr.bf16.mxu0 0
        %758 = vmatpush1.bf16.msra.mxu0 0
        %759 = vmatprep.subr.bf16.mxu0 0
        %760 = vmatpush1.bf16.msra.mxu0 0
        %761 = vmatprep.subr.bf16.mxu0 0
        %762 = vmatpush1.bf16.msra.mxu0 0
        %763 = vmatprep.subr.bf16.mxu0 0
        %764 = vmatpush1.bf16.msra.mxu0 0
        %765 = vmatprep.subr.bf16.mxu0 0
        %766 = vmatpush1.bf16.msra.mxu0 0
        %767 = vmatprep.subr.bf16.mxu0 0
        %768 = vmatpush1.bf16.msra.mxu0 0
        %769 = vmatprep.mubr.bf16.mxu0 0
        %770 = vmatmul.mubr.bf16.gmra.mrb[0].mxu0 %v687
        %v771 = vpop.f32.mrb[0].mxu0
        %v772 = vadd.f32 0.0, %v771
        %v773 = vpop.f32.mrb[0].mxu0
        %v774 = vpop.f32.mrb[0].mxu0
        %v775 = vadd.f32 0.0, %v774
        %v776 = vpop.f32.mrb[0].mxu0
        %777 = vdwg.mxu0
        %v778 = vadd.f32 %v660, %v772
        %v779 = vadd.f32 %v663, %v775
        %v780 = vld [vmem:[%s4] sm:$0x1]
        %v782 = vlaneseq
        %v783 = vshrl.u32 %v782, 7
        %v784 = vsub.s32 0, %v783
        %v785 = vrot.slane %v780, %v784
        %v787 = vadd.f32 %v778, %v785
        %v788 = vadd.f32 %v779, %v785
        %v789 = vmax.f32 %v787, 0.0
        %v790 = vmax.f32 %v788, 0.0
        %v791 = vpack.c.bf16 %v790, %v789
        %v793 = vunpack.c.l.b16 %v791
        %v794 = vunpack.c.h.b16 %v791
        %v795 = vpack.c.b16 %v793, %v793
        %v796 = vpack.c.b16 %v794, %v794
        %799 = vst [vmem:[%s232] sm:$0xf] %v795
        %800 = vst [vmem:[%s232 + $0x4] sm:$0xf] %v796
        %s801 = sand.u32 %s138, 1
        %s802 = scalar_lea.sflag [#allocation4], %s801
        %s803 = sand.u32 %s138, 1
        %s804 = smul.addr %s803, 8
        %s805 = scalar_lea.vmem [#allocation5], %s804
        // Predicated region
        $region45: #{tpu_custom_call.1} parent=39 // pred_check
          %p806 = pneg %p148
        $region46: #{tpu_custom_call.1} parent=39 // pred_check_branch
          %808 = sbr.rel (%p806) target = $region48
        $region47: #{tpu_custom_call.1} parent=39 // pred_region
          %s810 = ssub.s32 128, 128
          %811 = vsyncadd %s802, %s810
          %s812 = smul.addr %s20, 2
          %s813 = smul.addr %s812, 64
          %s814 = scalar_lea.hbm %s5, %s813
          %s815 = sshll.u32 %s805, 4
          %s816 = int_to_ptr.vmem [resolvable:$true] %s815
          %821 = dma.vmem_to_hbm [thread:$0]  %s816, 128, %s814, %s802, 64, 64, 4
        $region48: #{tpu_custom_call.1} parent=39 // pred_fallthru
          _
      $region40: #{tpu_custom_call.1} parent=5 // pred_fallthru
        _
      %p822 = scmp.le.s32.totalorder 2, %s15
      // Predicated region
      $region49: #{tpu_custom_call.1} parent=5 // pred_check
        %p823 = pneg %p822
      $region50: #{tpu_custom_call.1} parent=5 // pred_check_branch
        %825 = sbr.rel (%p823) target = $region52
      $region51: #{tpu_custom_call.1} parent=5 // pred_region
        %s826 = ssub.s32 %s15, 2
        // Predicated region
        $region53: #{tpu_custom_call.1} parent=51 // pred_check
          %p827 = pneg %p154
        $region54: #{tpu_custom_call.1} parent=51 // pred_check_branch
          %829 = sbr.rel (%p827) target = $region56
        $region55: #{tpu_custom_call.1} parent=51 // pred_region
          %s830 = sand.u32 %s139, 1
          %s831 = scalar_lea.sflag [#allocation4], %s830
          %s832 = sand.u32 %s139, 1
          %s833 = smul.addr %s832, 8
          %s834 = scalar_lea.vmem [#allocation5], %s833
          %835 = dma.done %s831, 128
        $region56: #{tpu_custom_call.1} parent=51 // pred_fallthru
          _
      $region52: #{tpu_custom_call.1} parent=5 // pred_fallthru
        _
    $region6: #{tpu_custom_call.1} parent=1 // loop_footer
      %s19 = sadd.s32 1, %s15
    $region7: #{tpu_custom_call.1} parent=1 // loop_footer_branch
      %14 = sbr.rel target = $region3
    $region8: #{tpu_custom_call.1} parent=1 // loop_exit
      _
    %836 = vsyncpa [#allocation3], 1
    %s837 = scalar_lea.sflag [#allocation3], 1
    %838 = vsyncpa %s837, 1
    %839 = vsyncpa [#allocation4], 1
    %s840 = scalar_lea.sflag [#allocation4], 1
    %841 = vsyncpa %s840, 1

</llo_original>
